<compile_context>
chip_gen: v6e
topology: v6e:2x2x1
jax: 0.10.0
libtpu: 0.0.40
codegen_flags: <defaults>
</compile_context>

<pallas_src>
import numpy as np
import jax
import jax.numpy as jnp
from jax import lax
from jax.experimental import pallas as pl
from jax.experimental.pallas import tpu as pltpu

B = 2            # graphs per batch (grid size)
N = 21           # nodes per graph
F_IN = 3         # input feature dim
H = 20           # lin1 output dim
NB = 32          # padded rows per graph (next multiple of 8 above N; was 128)
OUT_PAD = 128    # lane-dense lin2 output width (N padded to the lane width)

# Packed-parameter slab layout: (P_ROWS, OUT_PAD); payload in cols [0:H]/[0:N].
W1_ROW = 0                    # rows 0..2   : w1 (3, 20)
B1_ROW = F_IN                 # row  3      : b1 (1, 20)
W2_ROW = F_IN + 1             # rows 4..23  : w2 (20, 21)
B2_ROW = W2_ROW + H           # row 24      : b2 (1, 21)
P_ROWS = B2_ROW + 1           # 25

NEG_FILL = -10000000000.0


def dummy_model_kernel(xs_ref, params_ref, mask_ref, out_ref):
    # Per grid step (one graph):
    #   xs_ref:     (NB, 4)        cols 0:3 node features, col 3 prev-node one-hot
    #                              (rows >= N are zero pad)
    #   params_ref: (P_ROWS, 128)  packed w1/b1/w2/b2 (resident across steps)
    #   mask_ref:   (1, NB)        1.0 where masked, 0.0 elsewhere (lanes >= N are 0)
    #   out_ref:    (1, NB)        logits row (lanes >= N are don't-care garbage)

    # ---- lin1 (K=3): three VPU broadcast FMAs + bias; skip a tiny MXU pass ----
    h = (xs_ref[:, 0:1] * params_ref[W1_ROW + 0:W1_ROW + 1, 0:H]
         + xs_ref[:, 1:2] * params_ref[W1_ROW + 1:W1_ROW + 2, 0:H]
         + xs_ref[:, 2:3] * params_ref[W1_ROW + 2:W1_ROW + 3, 0:H]
         + params_ref[B1_ROW:B1_ROW + 1, 0:H])                        # (NB, H)
    h = jnp.maximum(h, 0.0)                                           # ReLU

    # ---- lin2: one flat MXU matmul, lane-padded to 128 (cols >= N are exactly 0) ----
    w2 = params_ref[W2_ROW:W2_ROW + H, :]                             # (H, 128)
    b2 = params_ref[B2_ROW:B2_ROW + 1, :]                             # (1, 128)
    emb = jnp.dot(h, w2, preferred_element_type=jnp.float32) + b2     # (NB, 128), 8 vregs

    # ---- prev-node embedding: one-hot select as a tiny MXU contraction over rows
    # (pad rows have sel == 0, so they contribute nothing). Gather-free, no XLU reduce.
    sel = xs_ref[:, F_IN:F_IN + 1]                                    # (NB, 1)
    prev = lax.dot_general(sel, emb,
                           dimension_numbers=(((0,), (0,)), ((), ())),
                           preferred_element_type=jnp.float32)        # (1, 128)

    # ---- logits[n] = <emb[n, :], prev>: contract the embedding (lane) dim of both
    # operands directly — no transposed copy of emb is materialized.
    logits = lax.dot_general(prev, emb,
                             dimension_numbers=(((1,), (1,)), ((), ())),
                             preferred_element_type=jnp.float32)      # (1, NB)

    # ---- masked_fill (replace semantics) + single dense store of the row ----
    out_ref[...] = jnp.where(mask_ref[...] > 0.5, NEG_FILL, logits)


def _pack_inputs(x, prev_onehot):
    # (B, N, F_IN) + (B, N) one-hot -> row-padded (B, NB, F_IN+1).
    feat = jnp.concatenate([x, prev_onehot[:, :, None]], axis=-1)     # (B, N, 4)
    return jnp.pad(feat, ((0, 0), (0, NB - N), (0, 0)))               # (B, NB, 4)


def _pack_params(w1, b1, w2, b2):
    params = jnp.zeros((P_ROWS, OUT_PAD), jnp.float32)
    params = params.at[W1_ROW:W1_ROW + F_IN, 0:H].set(w1)
    params = params.at[B1_ROW:B1_ROW + 1, 0:H].set(b1)
    params = params.at[W2_ROW:W2_ROW + H, 0:N].set(w2)
    params = params.at[B2_ROW:B2_ROW + 1, 0:N].set(b2)
    return params


def _pack_mask(mask_f32):
    m = jnp.pad(mask_f32, ((0, 0), (0, NB - N)))                      # (B, NB)
    return m.reshape(B, 1, NB)


@jax.jit
def dummy_model_forward(x, w1, b1, w2, b2, prev_onehot, mask_f32):
    xs = _pack_inputs(x, prev_onehot)
    params = _pack_params(w1, b1, w2, b2)
    mask = _pack_mask(mask_f32)
    out = pl.pallas_call(
        dummy_model_kernel,
        out_shape=jax.ShapeDtypeStruct((B, 1, NB), jnp.float32),
        grid=(B,),
        in_specs=[
            pl.BlockSpec((pl.Squeezed(), NB, F_IN + 1), lambda g: (g, 0, 0)),
            pl.BlockSpec((P_ROWS, OUT_PAD), lambda g: (0, 0)),   # resident params
            pl.BlockSpec((pl.Squeezed(), 1, NB), lambda g: (g, 0, 0)),
        ],
        out_specs=pl.BlockSpec((pl.Squeezed(), 1, NB), lambda g: (g, 0, 0)),
        compiler_params=pltpu.CompilerParams(
            dimension_semantics=("parallel",)),
        cost_estimate=pl.CostEstimate(
            flops=B * (2 * NB * F_IN * H + 2 * NB * H * OUT_PAD + 4 * NB * OUT_PAD),
            transcendentals=0,
            bytes_accessed=4 * (B * NB * (F_IN + 1) + P_ROWS * OUT_PAD + 2 * B * NB),
        ),
    )(xs, params, mask)
    # Lanes >= N of each output row are garbage (mask is 0 there): slicing to N
    # here is load-bearing — keep this invariant if the wrapper changes.
    return out.reshape(B, NB)[:, :N]                                  # (B, N)


def reference_forward(x, w1, b1, w2, b2, prev_node, mask_bool):
    # Pure-JAX reference mirroring the PyTorch forward.
    xf = x.reshape(B * N, F_IN)
    h = jnp.maximum(xf @ w1 + b1, 0.0)
    emb = (h @ w2 + b2).reshape(B, N, N)
    idxs = jnp.arange(B) * N
    prev = emb.reshape(B * N, N)[idxs + prev_node]                    # (B, N)
    logits = jnp.einsum('bnm,bm->bn', emb, prev)
    return jnp.where(mask_bool, NEG_FILL, logits)


if __name__ == "__main__":
    key = jax.random.PRNGKey(0)
    k_x, k_w1, k_b1, k_w2, k_b2, k_prev, k_edges = jax.random.split(key, 7)

    # Deterministic synthetic inputs.
    x = jax.random.normal(k_x, (B, N, F_IN), dtype=jnp.float32)

    # Deterministic "Linear" parameter init (shapes from nn.Linear(3,20)/(20,21)).
    w1 = jax.random.uniform(k_w1, (F_IN, H), minval=-0.5, maxval=0.5, dtype=jnp.float32)
    b1 = jax.random.uniform(k_b1, (1, H), minval=-0.5, maxval=0.5, dtype=jnp.float32)
    w2 = jax.random.uniform(k_w2, (H, N), minval=-0.2, maxval=0.2, dtype=jnp.float32)
    b2 = jax.random.uniform(k_b2, (1, N), minval=-0.2, maxval=0.2, dtype=jnp.float32)

    # prev_node: one index per graph in [0, N).
    prev_node = jax.random.randint(k_prev, (B,), 0, N, dtype=jnp.int32)
    prev_onehot = jax.nn.one_hot(prev_node, N, dtype=jnp.float32)

    # Synthetic per-graph edge_index and get_mask() semantics.
    # TODO(synk): variable-length edge_index set-union has no clean in-kernel
    # equivalent; the mask is built host-side and only masked_fill is in-kernel.
    edge_src = np.array(jax.random.randint(k_edges, (B, 8), 0, N))
    edge_dst = np.roll(edge_src, 1, axis=1)
    mask_np = np.zeros((B, N), dtype=bool)
    for i in range(B):
        unique = sorted(set(edge_src[i].tolist()) | set(edge_dst[i].tolist()))
        mask_np[i, np.array(unique)] = True
    mask_np[:, 0] = False
    mask_bool = jnp.asarray(mask_np)
    mask_f32 = mask_bool.astype(jnp.float32)

    out = dummy_model_forward(x, w1, b1, w2, b2, prev_onehot, mask_f32)
    out = jax.block_until_ready(out)

    ref = reference_forward(x, w1, b1, w2, b2, prev_node, mask_bool)
    np.testing.assert_allclose(np.asarray(out), np.asarray(ref), rtol=1e-5, atol=1e-5)

    print("KERNEL_OK")
</pallas_src>

<mosaic_0001>
module attributes {stable_mosaic.version = 11 : i64} {
  func.func @dummy_model_kernel(%arg0: i32, %arg1: memref<1x32x4xf32, #tpu.memory_space<vmem>>, %arg2: memref<25x128xf32, #tpu.memory_space<vmem>>, %arg3: memref<1x1x32xf32, #tpu.memory_space<vmem>>, %arg4: memref<1x1x32xf32, #tpu.memory_space<vmem>>) attributes {dimension_semantics = [#tpu.dimension_semantics<parallel>], iteration_bounds = array<i64: 2>, scalar_prefetch = 0 : i64, scratch_operands = 0 : i64, tpu.core_type = #tpu.core_type<tc>, window_params = [{transform_indices = @transform_0, window_bounds = array<i64: 1, 32, 4>}, {pipeline_mode = #tpu.pipeline_mode<synchronous>, transform_indices = @transform_1, window_bounds = array<i64: 25, 128>}, {transform_indices = @transform_2, window_bounds = array<i64: 1, 1, 32>}, {transform_indices = @transform_3, window_bounds = array<i64: 1, 1, 32>}]} {
    %c0 = arith.constant 0 : index
    %c0_0 = arith.constant 0 : index
    %c0_1 = arith.constant 0 : index
    %0 = vector.load %arg1[%c0, %c0_0, %c0_1] : memref<1x32x4xf32, #tpu.memory_space<vmem>>, vector<1x32x1xf32>
    %1 = vector.shape_cast %0 : vector<1x32x1xf32> to vector<32x1xf32>
    %c0_2 = arith.constant 0 : index
    %c0_3 = arith.constant 0 : index
    %2 = vector.load %arg2[%c0_2, %c0_3] : memref<25x128xf32, #tpu.memory_space<vmem>>, vector<1x20xf32>
    %3 = vector.broadcast %1 : vector<32x1xf32> to vector<32x20xf32>
    %4 = vector.broadcast %2 : vector<1x20xf32> to vector<32x20xf32>
    %5 = arith.mulf %3, %4 : vector<32x20xf32>
    %c0_4 = arith.constant 0 : index
    %c0_5 = arith.constant 0 : index
    %c1 = arith.constant 1 : index
    %6 = vector.load %arg1[%c0_4, %c0_5, %c1] : memref<1x32x4xf32, #tpu.memory_space<vmem>>, vector<1x32x1xf32>
    %7 = vector.shape_cast %6 : vector<1x32x1xf32> to vector<32x1xf32>
    %c1_6 = arith.constant 1 : index
    %c0_7 = arith.constant 0 : index
    %8 = vector.load %arg2[%c1_6, %c0_7] : memref<25x128xf32, #tpu.memory_space<vmem>>, vector<1x20xf32>
    %9 = vector.broadcast %7 : vector<32x1xf32> to vector<32x20xf32>
    %10 = vector.broadcast %8 : vector<1x20xf32> to vector<32x20xf32>
    %11 = arith.mulf %9, %10 : vector<32x20xf32>
    %12 = arith.addf %5, %11 : vector<32x20xf32>
    %c0_8 = arith.constant 0 : index
    %c0_9 = arith.constant 0 : index
    %c2 = arith.constant 2 : index
    %13 = vector.load %arg1[%c0_8, %c0_9, %c2] : memref<1x32x4xf32, #tpu.memory_space<vmem>>, vector<1x32x1xf32>
    %14 = vector.shape_cast %13 : vector<1x32x1xf32> to vector<32x1xf32>
    %c2_10 = arith.constant 2 : index
    %c0_11 = arith.constant 0 : index
    %15 = vector.load %arg2[%c2_10, %c0_11] : memref<25x128xf32, #tpu.memory_space<vmem>>, vector<1x20xf32>
    %16 = vector.broadcast %14 : vector<32x1xf32> to vector<32x20xf32>
    %17 = vector.broadcast %15 : vector<1x20xf32> to vector<32x20xf32>
    %18 = arith.mulf %16, %17 : vector<32x20xf32>
    %19 = arith.addf %12, %18 : vector<32x20xf32>
    %c3 = arith.constant 3 : index
    %c0_12 = arith.constant 0 : index
    %20 = vector.load %arg2[%c3, %c0_12] : memref<25x128xf32, #tpu.memory_space<vmem>>, vector<1x20xf32>
    %21 = vector.broadcast %20 : vector<1x20xf32> to vector<32x20xf32>
    %22 = arith.addf %19, %21 : vector<32x20xf32>
    %cst = arith.constant 0.000000e+00 : f32
    %23 = vector.broadcast %cst : f32 to vector<32x20xf32>
    %24 = arith.maximumf %22, %23 : vector<32x20xf32>
    %c4 = arith.constant 4 : index
    %c0_13 = arith.constant 0 : index
    %25 = vector.load %arg2[%c4, %c0_13] : memref<25x128xf32, #tpu.memory_space<vmem>>, vector<20x128xf32>
    %c24 = arith.constant 24 : index
    %c0_14 = arith.constant 0 : index
    %26 = vector.load %arg2[%c24, %c0_14] : memref<25x128xf32, #tpu.memory_space<vmem>>, vector<1x128xf32>
    %cst_15 = arith.constant dense<0.000000e+00> : vector<32x128xf32>
    %27 = tpu.matmul %24, %25, %cst_15 {dimension_numbers = #tpu.dot_dimension_numbers<[1], [0], [0], [1], [0, 0, 1, 1], [], []>} : vector<32x20xf32>, vector<20x128xf32>, vector<32x128xf32> -> vector<32x128xf32>
    %28 = vector.broadcast %26 : vector<1x128xf32> to vector<32x128xf32>
    %29 = arith.addf %27, %28 : vector<32x128xf32>
    %c0_16 = arith.constant 0 : index
    %c0_17 = arith.constant 0 : index
    %c3_18 = arith.constant 3 : index
    %30 = vector.load %arg1[%c0_16, %c0_17, %c3_18] : memref<1x32x4xf32, #tpu.memory_space<vmem>>, vector<1x32x1xf32>
    %31 = vector.shape_cast %30 : vector<1x32x1xf32> to vector<32x1xf32>
    %cst_19 = arith.constant dense<0.000000e+00> : vector<1x128xf32>
    %32 = tpu.matmul %31, %29, %cst_19 {dimension_numbers = #tpu.dot_dimension_numbers<[0], [0], [1], [1], [0, 1, 1, 1], [], []>} : vector<32x1xf32>, vector<32x128xf32>, vector<1x128xf32> -> vector<1x128xf32>
    %cst_20 = arith.constant dense<0.000000e+00> : vector<1x32xf32>
    %33 = tpu.matmul %32, %29, %cst_20 {dimension_numbers = #tpu.dot_dimension_numbers<[1], [1], [0], [0], [0, 0, 1, 0], [], []>} : vector<1x128xf32>, vector<32x128xf32>, vector<1x32xf32> -> vector<1x32xf32>
    %c0_21 = arith.constant 0 : index
    %c0_22 = arith.constant 0 : index
    %c0_23 = arith.constant 0 : index
    %34 = vector.load %arg3[%c0_21, %c0_22, %c0_23] : memref<1x1x32xf32, #tpu.memory_space<vmem>>, vector<1x1x32xf32>
    %35 = vector.shape_cast %34 : vector<1x1x32xf32> to vector<1x32xf32>
    %cst_24 = arith.constant 5.000000e-01 : f32
    %36 = vector.broadcast %cst_24 : f32 to vector<1x32xf32>
    %37 = arith.cmpf ogt, %35, %36 : vector<1x32xf32>
    %cst_25 = arith.constant -1.000000e+10 : f32
    %38 = vector.broadcast %cst_25 : f32 to vector<1x32xf32>
    %39 = arith.select %37, %38, %33 : vector<1x32xi1>, vector<1x32xf32>
    %c0_26 = arith.constant 0 : index
    %c0_27 = arith.constant 0 : index
    %c0_28 = arith.constant 0 : index
    %40 = vector.load %arg4[%c0_26, %c0_27, %c0_28] : memref<1x1x32xf32, #tpu.memory_space<vmem>>, vector<1x1x32xf32>
    %41 = vector.shape_cast %40 : vector<1x1x32xf32> to vector<1x32xf32>
    %42 = vector.shape_cast %39 : vector<1x32xf32> to vector<1x1x32xf32>
    tpu.vector_store %arg4[%c0_26, %c0_27, %c0_28], %42 {strides = array<i32>} : memref<1x1x32xf32, #tpu.memory_space<vmem>>, vector<1x1x32xf32>,
    return
  }
  func.func @transform_0(%arg0: i32) -> (i32, i32, i32) {
    %c0_i32 = arith.constant 0 : i32
    %c0_i32_0 = arith.constant 0 : i32
    %c0_i32_1 = arith.constant 0 : i32
    return %arg0, %c0_i32, %c0_i32_0 : i32, i32, i32
  }
  func.func @transform_1(%arg0: i32) -> (i32, i32) {
    %c0_i32 = arith.constant 0 : i32
    %c0_i32_0 = arith.constant 0 : i32
    %c0_i32_1 = arith.constant 0 : i32
    return %c0_i32, %c0_i32_0 : i32, i32
  }
  func.func @transform_2(%arg0: i32) -> (i32, i32, i32) {
    %c0_i32 = arith.constant 0 : i32
    %c0_i32_0 = arith.constant 0 : i32
    %c0_i32_1 = arith.constant 0 : i32
    return %arg0, %c0_i32, %c0_i32_0 : i32, i32, i32
  }
  func.func @transform_3(%arg0: i32) -> (i32, i32, i32) {
    %c0_i32 = arith.constant 0 : i32
    %c0_i32_0 = arith.constant 0 : i32
    %c0_i32_1 = arith.constant 0 : i32
    return %arg0, %c0_i32, %c0_i32_0 : i32, i32, i32
  }
}

</mosaic_0001>

<llo_original>
// kernel: dummy_model_forward.1
$region0: #{dummy_model_forward.1}
  #allocation0 [shape = 'u32[]', space=smem, size = 0x4, offset = 0x4, fixed_abs, tag = 'smem constant byte address 0x4 - core index']
  #allocation1 [shape = 'u32[144,128]{1,0:T(1,128)}', space=vmem, size = 0x12000, scoped, tag = 'internal scratch']
  %s0 = inlined_call_operand.vmem [shape: f32[2,32,4], index: 0, kind: input, shape index: {}]
  %s1 = inlined_call_operand.vmem [shape: f32[25,128], index: 1, kind: input, shape index: {}]
  %s2 = inlined_call_operand.vmem [shape: f32[2,1,32], index: 2, kind: input, shape index: {}]
  %s3 = inlined_call_operand.hbm [shape: f32[2,1,32], index: 3, kind: output, shape index: {}]
  %s4 = sld [smem:[#allocation0]]
  $region45: #{dummy_model_forward.1} parent=0
    _
  %s6 = ssub.s32 1, %s4
  %s7 = scalar_select 0, %s6, %s4
  $region1: #{dummy_model_forward.1} parent=0
    #allocation2 [shape = 'u8[1024]{0}', space=vmem, size = 0x400, scoped, tag = 'output window, operand 0']
    #allocation3 [shape = 's32[2]{0}', space=sflag, size = 0x8, scoped, tag = 'scoped memory for dummy_model_forward.1']
    %8 = vsyncpa [#allocation3], 0
    %s9 = scalar_lea.sflag [#allocation3], 1
    %10 = vsyncpa %s9, 0
    loop: start=0, step=1, limit=4
    $region2: #{dummy_model_forward.1} parent=1 // loop_pre_header
      _
    $region3: #{dummy_model_forward.1} parent=1 // loop_header
      %s12 = sphi 0, %s16
      %p13 = scmp.ge.s32.totalorder %s12, 4
      %s22 = sphi 0, %s24
      %s25 = sphi 0, %s22
      %s26 = sphi 0, %s25
      %s42 = sphi 0, %s26
      %s46 = sphi 0, %s46
      %s48 = sphi 0, %s46
      %s49 = sphi 0, %s48
      %s63 = sphi 0, %s49
      %s69 = sphi 0, %s71
      %s72 = sphi 0, %s69
      %s73 = sphi 0, %s72
      %s89 = sphi 0, %s73
      %s95 = sphi 0, %s97
      %s98 = sphi 0, %s95
      %s99 = sphi 0, %s98
      %s115 = sphi 0, %s99
    $region4: #{dummy_model_forward.1} parent=1 // loop_header_branch
      %15 = sbr.rel (%p13) target = $region8
    $region5: #{dummy_model_forward.1} parent=1 // loop_body
      %s17 = ssub.s32 %s12, 1
      %s18 = ssub.s32 %s12, 2
      %s19 = sadd.s32 %s12, 1
      %s20 = ssub.s32 %s12, %s19
      %p21 = scmp.eq.s32.totalorder %s20, 0
      %s23 = sadd.s32 %s22, 1
      %s24 = scalar_select %p21, %s22, %s23
      %p27 = pneg %p21
      %p28 = scmp.eq.s32.totalorder %s12, 1
      %p29 = por %p27, %p28
      %p30 = scmp.ne.s32.totalorder %s22, %s25
      %p31 = scmp.eq.s32.totalorder %s12, 0
      %p32 = por %p30, %p31
      %p33 = scmp.ne.s32.totalorder %s22, %s25
      %p34 = scmp.eq.s32.totalorder %s17, 1
      %p35 = por %p33, %p34
      %p36 = scmp.ne.s32.totalorder %s25, %s26
      %p37 = scmp.eq.s32.totalorder %s17, 0
      %p38 = por %p36, %p37
      %p39 = scmp.ne.s32.totalorder %s25, %s26
      %p40 = scmp.eq.s32.totalorder %s18, 1
      %p41 = por %p39, %p40
      %p43 = scmp.ne.s32.totalorder %s26, %s42
      %p44 = scmp.eq.s32.totalorder %s18, 0
      %p45 = por %p43, %p44
      %s47 = sadd.s32 %s46, 1
      %p50 = scmp.eq.s32.totalorder %s12, 1
      %p51 = scmp.ne.s32.totalorder %s46, %s48
      %p52 = scmp.eq.s32.totalorder %s12, 0
      %p53 = por %p51, %p52
      %p54 = scmp.ne.s32.totalorder %s46, %s48
      %p55 = scmp.eq.s32.totalorder %s17, 1
      %p56 = por %p54, %p55
      %p57 = scmp.ne.s32.totalorder %s48, %s49
      %p58 = scmp.eq.s32.totalorder %s17, 0
      %p59 = por %p57, %p58
      %p60 = scmp.ne.s32.totalorder %s48, %s49
      %p61 = scmp.eq.s32.totalorder %s18, 1
      %p62 = por %p60, %p61
      %p64 = scmp.ne.s32.totalorder %s49, %s63
      %p65 = scmp.eq.s32.totalorder %s18, 0
      %p66 = por %p64, %p65
      %s67 = ssub.s32 %s12, %s19
      %p68 = scmp.eq.s32.totalorder %s67, 0
      %s70 = sadd.s32 %s69, 1
      %s71 = scalar_select %p68, %s69, %s70
      %p74 = pneg %p68
      %p75 = scmp.eq.s32.totalorder %s12, 1
      %p76 = por %p74, %p75
      %p77 = scmp.ne.s32.totalorder %s69, %s72
      %p78 = scmp.eq.s32.totalorder %s12, 0
      %p79 = por %p77, %p78
      %p80 = scmp.ne.s32.totalorder %s69, %s72
      %p81 = scmp.eq.s32.totalorder %s17, 1
      %p82 = por %p80, %p81
      %p83 = scmp.ne.s32.totalorder %s72, %s73
      %p84 = scmp.eq.s32.totalorder %s17, 0
      %p85 = por %p83, %p84
      %p86 = scmp.ne.s32.totalorder %s72, %s73
      %p87 = scmp.eq.s32.totalorder %s18, 1
      %p88 = por %p86, %p87
      %p90 = scmp.ne.s32.totalorder %s73, %s89
      %p91 = scmp.eq.s32.totalorder %s18, 0
      %p92 = por %p90, %p91
      %s93 = ssub.s32 %s12, %s19
      %p94 = scmp.eq.s32.totalorder %s93, 0
      %s96 = sadd.s32 %s95, 1
      %s97 = scalar_select %p94, %s95, %s96
      %p100 = pneg %p94
      %p101 = scmp.eq.s32.totalorder %s12, 1
      %p102 = por %p100, %p101
      %p103 = scmp.ne.s32.totalorder %s95, %s98
      %p104 = scmp.eq.s32.totalorder %s12, 0
      %p105 = por %p103, %p104
      %p106 = scmp.ne.s32.totalorder %s95, %s98
      %p107 = scmp.eq.s32.totalorder %s17, 1
      %p108 = por %p106, %p107
      %p109 = scmp.ne.s32.totalorder %s98, %s99
      %p110 = scmp.eq.s32.totalorder %s17, 0
      %p111 = por %p109, %p110
      %p112 = scmp.ne.s32.totalorder %s98, %s99
      %p113 = scmp.eq.s32.totalorder %s18, 1
      %p114 = por %p112, %p113
      %p116 = scmp.ne.s32.totalorder %s99, %s115
      %p117 = scmp.eq.s32.totalorder %s18, 0
      %p118 = por %p116, %p117
      %p119 = scmp.le.s32.totalorder 1, %s12
      %p120 = scmp.lt.s32.totalorder %s12, 3
      %p121 = pnand %p119, %p120
      %p122 = pneg %p121
      // Predicated region
      $region9: #{dummy_model_forward.1} parent=5 // pred_check
        _
      $region10: #{dummy_model_forward.1} parent=5 // pred_check_branch
        %124 = sbr.rel (%p121) target = $region12
      $region11: #{dummy_model_forward.1} parent=5 // pred_region
        %s125 = ssub.s32 %s12, 1
        // Predicated region
        $region13: #{dummy_model_forward.1} parent=11 // pred_check
          %p126 = pneg %p59
        $region14: #{dummy_model_forward.1} parent=11 // pred_check_branch
          %128 = sbr.rel (%p126) target = $region16
        $region15: #{dummy_model_forward.1} parent=11 // pred_region
          _
        $region16: #{dummy_model_forward.1} parent=11 // pred_fallthru
          _
      $region12: #{dummy_model_forward.1} parent=5 // pred_fallthru
        _
      %p129 = scmp.lt.s32.totalorder %s12, 2
      // Predicated region
      $region17: #{dummy_model_forward.1} parent=5 // pred_check
        %p130 = pneg %p129
      $region18: #{dummy_model_forward.1} parent=5 // pred_check_branch
        %132 = sbr.rel (%p130) target = $region20
      $region19: #{dummy_model_forward.1} parent=5 // pred_region
        // Predicated region
        $region21: #{dummy_model_forward.1} parent=19 // pred_check
          %p133 = pneg %p32
        $region22: #{dummy_model_forward.1} parent=19 // pred_check_branch
          %135 = sbr.rel (%p133) target = $region24
        $region23: #{dummy_model_forward.1} parent=19 // pred_region
          %p136 = scmp.lt.s32.totalorder %s12, 1
          %s137 = scalar_select %p136, %s12, 1
          %s138 = smul.addr %s137, 4
          %s139 = smul.addr %s138, 8
          %s140 = scalar_lea.vmem %s0, %s139
        $region24: #{dummy_model_forward.1} parent=19 // pred_fallthru
          _
        // Predicated region
        $region25: #{dummy_model_forward.1} parent=19 // pred_check
          %p141 = pneg %p79
        $region26: #{dummy_model_forward.1} parent=19 // pred_check_branch
          %143 = sbr.rel (%p141) target = $region28
        $region27: #{dummy_model_forward.1} parent=19 // pred_region
          %p144 = scmp.lt.s32.totalorder %s12, 1
          %s145 = scalar_select %p144, %s12, 1
          %s146 = scalar_lea.vmem %s2, %s145
        $region28: #{dummy_model_forward.1} parent=19 // pred_fallthru
          _
      $region20: #{dummy_model_forward.1} parent=5 // pred_fallthru
        _
      %p147 = scmp.le.s32.totalorder 1, %s12
      %p148 = scmp.lt.s32.totalorder %s12, 3
      %p149 = pnand %p147, %p148
      %p150 = pneg %p149
      // Predicated region
      $region29: #{dummy_model_forward.1} parent=5 // pred_check
        _
      $region30: #{dummy_model_forward.1} parent=5 // pred_check_branch
        %152 = sbr.rel (%p149) target = $region32
      $region31: #{dummy_model_forward.1} parent=5 // pred_region
        %s153 = ssub.s32 %s12, 1
        %p154 = scmp.lt.s32.totalorder %s17, 1
        %s155 = scalar_select %p154, %s17, 1
        %s156 = smul.addr %s155, 4
        %s157 = smul.addr %s156, 8
        %s158 = scalar_lea.vmem %s0, %s157
        %p159 = pneg %p38
        %p160 = pneg %p35
        %p161 = pneg %p59
        %p162 = pneg %p56
        %p163 = scmp.lt.s32.totalorder %s17, 1
        %s164 = scalar_select %p163, %s17, 1
        %s165 = scalar_lea.vmem %s2, %s164
        %p166 = pneg %p85
        %p167 = pneg %p82
        %p168 = pneg %p111
        %p169 = pneg %p108
        %s170 = sand.u32 %s98, 1
        %s171 = scalar_lea.sflag [#allocation3], %s170
        %s172 = sand.u32 %s98, 1
        %s173 = scalar_lea.vmem [#allocation2], %s172
        %p174 = scmp.lt.s32.totalorder %s17, 1
        %s175 = scalar_select %p174, %s17, 1
        %s176 = smul.addr %s175, 4
        %s177 = smul.addr %s176, 8
        %s178 = scalar_lea.vmem %s0, %s177
        %p179 = scmp.lt.s32.totalorder %s17, 1
        %s180 = scalar_select %p179, %s17, 1
        %s181 = scalar_lea.vmem %s2, %s180
        %v182 = vld [vmem:[%s178] sm:$0xff]
        %v183 = vld [vmem:[%s178 + $0x8] sm:$0xff]
        %v184 = vld [vmem:[%s178 + $0x10] sm:$0xff]
        %v185 = vld [vmem:[%s178 + $0x18] sm:$0xff]
        %v186 = vld [vmem:[%s1] sm:$0x1]
        %188 = vset.pattern.permute.xlu0 0
        %189 = vperm.xlu0 %188, %v182
        %v190 = vpop.permute.xlu0 %189
        %193 = vset.pattern.permute.xlu0 0
        %194 = vperm.xlu0 %193, %v183
        %v195 = vpop.permute.xlu0 %194
        %198 = vset.pattern.permute.xlu0 0
        %199 = vperm.xlu0 %198, %v184
        %v200 = vpop.permute.xlu0 %199
        %203 = vset.pattern.permute.xlu0 0
        %204 = vperm.xlu0 %203, %v185
        %v205 = vpop.permute.xlu0 %204
        %v207 = vlaneseq
        %v208 = vshrl.u32 %v207, 7
        %v209 = vsub.s32 0, %v208
        %v210 = vrot.slane %v186, %v209
        %v211 = vmul.f32 %v190, %v210
        %v212 = vmul.f32 %v195, %v210
        %v213 = vmul.f32 %v200, %v210
        %v214 = vmul.f32 %v205, %v210
        %v215 = vld [vmem:[%s1 + $0x1] sm:$0x1]
        %216 = vset.pattern.permute.xlu0 1
        %217 = vperm.xlu0 %216, %v182
        %v218 = vpop.permute.xlu0 %217
        %220 = vset.pattern.permute.xlu0 1
        %221 = vperm.xlu0 %220, %v183
        %v222 = vpop.permute.xlu0 %221
        %224 = vset.pattern.permute.xlu0 1
        %225 = vperm.xlu0 %224, %v184
        %v226 = vpop.permute.xlu0 %225
        %228 = vset.pattern.permute.xlu0 1
        %229 = vperm.xlu0 %228, %v185
        %v230 = vpop.permute.xlu0 %229
        %v232 = vlaneseq
        %v233 = vshrl.u32 %v232, 7
        %v234 = vsub.s32 0, %v233
        %v235 = vrot.slane %v215, %v234
        %v236 = vmul.f32 %v218, %v235
        %v237 = vmul.f32 %v222, %v235
        %v238 = vmul.f32 %v226, %v235
        %v239 = vmul.f32 %v230, %v235
        %v240 = vadd.f32 %v211, %v236
        %v241 = vadd.f32 %v212, %v237
        %v242 = vadd.f32 %v213, %v238
        %v243 = vadd.f32 %v214, %v239
        %v244 = vld [vmem:[%s1 + $0x2] sm:$0x1]
        %245 = vset.pattern.permute.xlu0 2
        %246 = vperm.xlu0 %245, %v182
        %v247 = vpop.permute.xlu0 %246
        %249 = vset.pattern.permute.xlu0 2
        %250 = vperm.xlu0 %249, %v183
        %v251 = vpop.permute.xlu0 %250
        %253 = vset.pattern.permute.xlu0 2
        %254 = vperm.xlu0 %253, %v184
        %v255 = vpop.permute.xlu0 %254
        %257 = vset.pattern.permute.xlu0 2
        %258 = vperm.xlu0 %257, %v185
        %v259 = vpop.permute.xlu0 %258
        %v261 = vlaneseq
        %v262 = vshrl.u32 %v261, 7
        %v263 = vsub.s32 0, %v262
        %v264 = vrot.slane %v244, %v263
        %v265 = vmul.f32 %v247, %v264
        %v266 = vmul.f32 %v251, %v264
        %v267 = vmul.f32 %v255, %v264
        %v268 = vmul.f32 %v259, %v264
        %v269 = vadd.f32 %v240, %v265
        %v270 = vadd.f32 %v241, %v266
        %v271 = vadd.f32 %v242, %v267
        %v272 = vadd.f32 %v243, %v268
        %v273 = vld [vmem:[%s1 + $0x3] sm:$0x1]
        %v274 = vlaneseq
        %v275 = vshrl.u32 %v274, 7
        %v276 = vsub.s32 0, %v275
        %v277 = vrot.slane %v273, %v276
        %v278 = vadd.f32 %v269, %v277
        %v279 = vadd.f32 %v270, %v277
        %v280 = vadd.f32 %v271, %v277
        %v281 = vadd.f32 %v272, %v277
        %v282 = vmax.f32 %v278, 0.0
        %v283 = vmax.f32 %v279, 0.0
        %v284 = vmax.f32 %v280, 0.0
        %v285 = vmax.f32 %v281, 0.0
        %v286 = vld [vmem:[%s1 + $0x4] sm:$0xff]
        %v287 = vld [vmem:[%s1 + $0xc] sm:$0xff]
        %v288 = vld [vmem:[%s1 + $0x14] sm:$0xf]
        %v289 = vld [vmem:[%s1 + $0x18] sm:$0x1]
        %v290 = vlaneseq
        %v291 = vshrl.u32 %v290, 7
        %v292 = vsub.s32 0, %v291
        %v293 = vrot.slane %v289, %v292
        %vm294 = vcmask 162816
        %v296 = vsel %vm294, %v282, 0
        %v299 = vsel %vm294, %v283, 0
        %v302 = vsel %vm294, %v284, 0
        %v305 = vsel %vm294, %v285, 0
        %vm307 = vcmask 1043456
        %v309 = vsel %vm307, %v288, 0
        %311 = vmatprep.subr.mxu0 0.0
        %312 = vmatpush1.msra.mxu0 0.0
        %313 = vmatprep.subr.mxu0 0.0
        %314 = vmatpush1.msra.mxu0 0.0
        %315 = vmatprep.subr.mxu0 0.0
        %316 = vmatpush1.msra.mxu0 0.0
        %317 = vmatprep.subr.mxu0 0.0
        %318 = vmatpush1.msra.mxu0 0.0
        %319 = vmatprep.subr.mxu0 0.0
        %320 = vmatpush1.msra.mxu0 0.0
        %321 = vmatprep.subr.mxu0 0.0
        %322 = vmatpush1.msra.mxu0 0.0
        %323 = vmatprep.subr.mxu0 0.0
        %324 = vmatpush1.msra.mxu0 0.0
        %325 = vmatprep.subr.mxu0 0.0
        %326 = vmatpush1.msra.mxu0 0.0
        %327 = vmatprep.subr.mxu0 0.0
        %328 = vmatpush1.msra.mxu0 0.0
        %329 = vmatprep.subr.mxu0 0.0
        %330 = vmatpush1.msra.mxu0 0.0
        %331 = vmatprep.subr.mxu0 0.0
        %332 = vmatpush1.msra.mxu0 0.0
        %333 = vmatprep.subr.mxu0 0.0
        %334 = vmatpush1.msra.mxu0 0.0
        %335 = vmatprep.subr.mxu0 0.0
        %336 = vmatpush1.msra.mxu0 0.0
        %337 = vmatprep.subr.mxu0 0.0
        %338 = vmatpush1.msra.mxu0 %v309
        %339 = vmatprep.subr.mxu0 0.0
        %340 = vmatpush1.msra.mxu0 %v287
        %341 = vmatprep.subr.mxu0 0.0
        %342 = vmatpush1.msra.mxu0 %v286
        %343 = vmatprep.subr.mxu0 0.0
        %344 = vmatpush2.msra.mxu0 0.0
        %345 = vmatprep.subr.mxu0 0.0
        %346 = vmatpush2.msra.mxu0 0.0
        %347 = vmatprep.subr.mxu0 0.0
        %348 = vmatpush2.msra.mxu0 0.0
        %349 = vmatprep.subr.mxu0 0.0
        %350 = vmatpush2.msra.mxu0 0.0
        %351 = vmatprep.subr.mxu0 0.0
        %352 = vmatpush2.msra.mxu0 0.0
        %353 = vmatprep.subr.mxu0 0.0
        %354 = vmatpush2.msra.mxu0 0.0
        %355 = vmatprep.subr.mxu0 0.0
        %356 = vmatpush2.msra.mxu0 0.0
        %357 = vmatprep.subr.mxu0 0.0
        %358 = vmatpush2.msra.mxu0 0.0
        %359 = vmatprep.subr.mxu0 0.0
        %360 = vmatpush2.msra.mxu0 0.0
        %361 = vmatprep.subr.mxu0 0.0
        %362 = vmatpush2.msra.mxu0 0.0
        %363 = vmatprep.subr.mxu0 0.0
        %364 = vmatpush2.msra.mxu0 0.0
        %365 = vmatprep.subr.mxu0 0.0
        %366 = vmatpush2.msra.mxu0 0.0
        %367 = vmatprep.subr.mxu0 0.0
        %368 = vmatpush2.msra.mxu0 0.0
        %369 = vmatprep.subr.mxu0 0.0
        %370 = vmatpush2.msra.mxu0 0.0
        %371 = vmatprep.subr.mxu0 0.0
        %372 = vmatpush2.msra.mxu0 0.0
        %373 = vmatprep.subr.mxu0 0.0
        %374 = vmatpush2.msra.mxu0 0.0
        %375 = vmatprep.mubr.f32.mxu0 0.0
        %376 = vmatmul.mubr.f32.gmra.mxu0 %v296
        %v377 = vpop.f32.mrf.mxu0
        %v378 = vadd.f32 %v293, %v377
        %v379 = vpop.f32.mrf.mxu0
        %380 = vmatprep.mubr.f32.mxu0 0.0
        %381 = vmatmul.mubr.f32.gmra.mxu0 %v299
        %v382 = vpop.f32.mrf.mxu0
        %v383 = vadd.f32 %v293, %v382
        %v384 = vpop.f32.mrf.mxu0
        %385 = vmatprep.mubr.f32.mxu0 0.0
        %386 = vmatmul.mubr.f32.gmra.mxu0 %v302
        %v387 = vpop.f32.mrf.mxu0
        %v388 = vadd.f32 %v293, %v387
        %v389 = vpop.f32.mrf.mxu0
        %390 = vmatprep.mubr.f32.mxu0 0.0
        %391 = vmatmul.mubr.f32.gmra.mxu0 %v305
        %v392 = vpop.f32.mrf.mxu0
        %v393 = vadd.f32 %v293, %v392
        %v394 = vpop.f32.mrf.mxu0
        %395 = vdwg.mxu0
        %396 = vrot.lane.b32.xlu0 %v182, 125
        %v397 = vpop.permute.xlu0 %396
        %398 = vrot.lane.b32.xlu0 %v183, 125
        %v399 = vpop.permute.xlu0 %398
        %400 = vrot.lane.b32.xlu0 %v184, 125
        %v401 = vpop.permute.xlu0 %400
        %402 = vrot.lane.b32.xlu0 %v185, 125
        %v403 = vpop.permute.xlu0 %402
        %408 = vxpose.xlu0.b32.start [1/16] %v397, 128
        %409 = vxpose.xlu0.b32.cont [2/16] %v399, 128
        %410 = vxpose.xlu0.b32.cont [3/16] %v401, 128
        %411 = vxpose.xlu0.b32.cont [4/16] %v403, 128
        %412 = vxpose.xlu0.b32.cont [5/16] 0.0, 128
        %413 = vxpose.xlu0.b32.cont [6/16] 0.0, 128
        %414 = vxpose.xlu0.b32.cont [7/16] 0.0, 128
        %415 = vxpose.xlu0.b32.cont [8/16] 0.0, 128
        %416 = vxpose.xlu0.b32.cont [9/16] 0.0, 128
        %417 = vxpose.xlu0.b32.cont [10/16] 0.0, 128
        %418 = vxpose.xlu0.b32.cont [11/16] 0.0, 128
        %419 = vxpose.xlu0.b32.cont [12/16] 0.0, 128
        %420 = vxpose.xlu0.b32.cont [13/16] 0.0, 128
        %421 = vxpose.xlu0.b32.cont [14/16] 0.0, 128
        %422 = vxpose.xlu0.b32.cont [15/16] 0.0, 128
        %423 = vxpose.xlu0.b32.end [16/16] 0.0, 128
        %v424 = vpop.trf.xlu0
        %v425 = vpop.trf.xlu0
        %v426 = vpop.trf.xlu0
        %v427 = vpop.trf.xlu0
        %v428 = vpop.trf.xlu0
        %v429 = vpop.trf.xlu0
        %v430 = vpop.trf.xlu0
        %v431 = vpop.trf.xlu0
        %v432 = vpop.trf.xlu0
        %v433 = vpop.trf.xlu0
        %v434 = vpop.trf.xlu0
        %v435 = vpop.trf.xlu0
        %v436 = vpop.trf.xlu0
        %v437 = vpop.trf.xlu0
        %v438 = vpop.trf.xlu0
        %v439 = vpop.trf.xlu0
        %vm440 = vcmask 261120
        %v442 = vsel %vm440, %v424, 0
        %444 = vmatprep.subr.mxu0 0.0
        %445 = vmatpush1.msra.mxu0 0.0
        %446 = vmatprep.subr.mxu0 0.0
        %447 = vmatpush1.msra.mxu0 0.0
        %448 = vmatprep.subr.mxu0 0.0
        %449 = vmatpush1.msra.mxu0 0.0
        %450 = vmatprep.subr.mxu0 0.0
        %451 = vmatpush1.msra.mxu0 0.0
        %452 = vmatprep.subr.mxu0 0.0
        %453 = vmatpush1.msra.mxu0 0.0
        %454 = vmatprep.subr.mxu0 0.0
        %455 = vmatpush1.msra.mxu0 0.0
        %456 = vmatprep.subr.mxu0 0.0
        %457 = vmatpush1.msra.mxu0 0.0
        %458 = vmatprep.subr.mxu0 0.0
        %459 = vmatpush1.msra.mxu0 0.0
        %460 = vmatprep.subr.mxu0 0.0
        %461 = vmatpush1.msra.mxu0 0.0
        %462 = vmatprep.subr.mxu0 0.0
        %463 = vmatpush1.msra.mxu0 0.0
        %464 = vmatprep.subr.mxu0 0.0
        %465 = vmatpush1.msra.mxu0 0.0
        %466 = vmatprep.subr.mxu0 0.0
        %467 = vmatpush1.msra.mxu0 0.0
        %468 = vmatprep.subr.mxu0 0.0
        %469 = vmatpush1.msra.mxu0 %v393
        %470 = vmatprep.subr.mxu0 0.0
        %471 = vmatpush1.msra.mxu0 %v388
        %472 = vmatprep.subr.mxu0 0.0
        %473 = vmatpush1.msra.mxu0 %v383
        %474 = vmatprep.subr.mxu0 0.0
        %475 = vmatpush1.msra.mxu0 %v378
        %476 = vmatprep.subr.mxu0 0.0
        %477 = vmatpush2.msra.mxu0 0.0
        %478 = vmatprep.subr.mxu0 0.0
        %479 = vmatpush2.msra.mxu0 0.0
        %480 = vmatprep.subr.mxu0 0.0
        %481 = vmatpush2.msra.mxu0 0.0
        %482 = vmatprep.subr.mxu0 0.0
        %483 = vmatpush2.msra.mxu0 0.0
        %484 = vmatprep.subr.mxu0 0.0
        %485 = vmatpush2.msra.mxu0 0.0
        %486 = vmatprep.subr.mxu0 0.0
        %487 = vmatpush2.msra.mxu0 0.0
        %488 = vmatprep.subr.mxu0 0.0
        %489 = vmatpush2.msra.mxu0 0.0
        %490 = vmatprep.subr.mxu0 0.0
        %491 = vmatpush2.msra.mxu0 0.0
        %492 = vmatprep.subr.mxu0 0.0
        %493 = vmatpush2.msra.mxu0 0.0
        %494 = vmatprep.subr.mxu0 0.0
        %495 = vmatpush2.msra.mxu0 0.0
        %496 = vmatprep.subr.mxu0 0.0
        %497 = vmatpush2.msra.mxu0 0.0
        %498 = vmatprep.subr.mxu0 0.0
        %499 = vmatpush2.msra.mxu0 0.0
        %500 = vmatprep.subr.mxu0 0.0
        %501 = vmatpush2.msra.mxu0 0.0
        %502 = vmatprep.subr.mxu0 0.0
        %503 = vmatpush2.msra.mxu0 0.0
        %504 = vmatprep.subr.mxu0 0.0
        %505 = vmatpush2.msra.mxu0 0.0
        %506 = vmatprep.subr.mxu0 0.0
        %507 = vmatpush2.msra.mxu0 0.0
        %508 = vmatprep.mubr.f32.mxu0 0.0
        %509 = vmatmul.mubr.f32.gmra.mxu0 %v442
        %v510 = vpop.f32.mrf.mxu0
        %v511 = vadd.f32 0.0, %v510
        %v512 = vpop.f32.mrf.mxu0
        %513 = vdwg.mxu0
        %514 = vmatprep.subr.mxu0 0.0
        %515 = vmatpush1.xpose.msra.mxu0 0.0
        %516 = vmatprep.subr.mxu0 0.0
        %517 = vmatpush1.xpose.msra.mxu0 0.0
        %518 = vmatprep.subr.mxu0 0.0
        %519 = vmatpush1.xpose.msra.mxu0 0.0
        %520 = vmatprep.subr.mxu0 0.0
        %521 = vmatpush1.xpose.msra.mxu0 0.0
        %522 = vmatprep.subr.mxu0 0.0
        %523 = vmatpush1.xpose.msra.mxu0 0.0
        %524 = vmatprep.subr.mxu0 0.0
        %525 = vmatpush1.xpose.msra.mxu0 0.0
        %526 = vmatprep.subr.mxu0 0.0
        %527 = vmatpush1.xpose.msra.mxu0 0.0
        %528 = vmatprep.subr.mxu0 0.0
        %529 = vmatpush1.xpose.msra.mxu0 0.0
        %530 = vmatprep.subr.mxu0 0.0
        %531 = vmatpush1.xpose.msra.mxu0 0.0
        %532 = vmatprep.subr.mxu0 0.0
        %533 = vmatpush1.xpose.msra.mxu0 0.0
        %534 = vmatprep.subr.mxu0 0.0
        %535 = vmatpush1.xpose.msra.mxu0 0.0
        %536 = vmatprep.subr.mxu0 0.0
        %537 = vmatpush1.xpose.msra.mxu0 0.0
        %538 = vmatprep.subr.mxu0 0.0
        %539 = vmatpush1.xpose.msra.mxu0 %v393
        %540 = vmatprep.subr.mxu0 0.0
        %541 = vmatpush1.xpose.msra.mxu0 %v388
        %542 = vmatprep.subr.mxu0 0.0
        %543 = vmatpush1.xpose.msra.mxu0 %v383
        %544 = vmatprep.subr.mxu0 0.0
        %545 = vmatpush1.xpose.msra.mxu0 %v378
        %546 = vmatprep.subr.mxu0 0.0
        %547 = vmatpush2.xpose.msra.mxu0 0.0
        %548 = vmatprep.subr.mxu0 0.0
        %549 = vmatpush2.xpose.msra.mxu0 0.0
        %550 = vmatprep.subr.mxu0 0.0
        %551 = vmatpush2.xpose.msra.mxu0 0.0
        %552 = vmatprep.subr.mxu0 0.0
        %553 = vmatpush2.xpose.msra.mxu0 0.0
        %554 = vmatprep.subr.mxu0 0.0
        %555 = vmatpush2.xpose.msra.mxu0 0.0
        %556 = vmatprep.subr.mxu0 0.0
        %557 = vmatpush2.xpose.msra.mxu0 0.0
        %558 = vmatprep.subr.mxu0 0.0
        %559 = vmatpush2.xpose.msra.mxu0 0.0
        %560 = vmatprep.subr.mxu0 0.0
        %561 = vmatpush2.xpose.msra.mxu0 0.0
        %562 = vmatprep.subr.mxu0 0.0
        %563 = vmatpush2.xpose.msra.mxu0 0.0
        %564 = vmatprep.subr.mxu0 0.0
        %565 = vmatpush2.xpose.msra.mxu0 0.0
        %566 = vmatprep.subr.mxu0 0.0
        %567 = vmatpush2.xpose.msra.mxu0 0.0
        %568 = vmatprep.subr.mxu0 0.0
        %569 = vmatpush2.xpose.msra.mxu0 0.0
        %570 = vmatprep.subr.mxu0 0.0
        %571 = vmatpush2.xpose.msra.mxu0 0.0
        %572 = vmatprep.subr.mxu0 0.0
        %573 = vmatpush2.xpose.msra.mxu0 0.0
        %574 = vmatprep.subr.mxu0 0.0
        %575 = vmatpush2.xpose.msra.mxu0 0.0
        %576 = vmatprep.subr.mxu0 0.0
        %577 = vmatpush2.xpose.msra.mxu0 0.0
        %578 = vmatprep.mubr.f32.mxu0 0.0
        %579 = vmatmul.mubr.f32.gmra.mxu0 %v511
        %v580 = vpop.f32.mrf.mxu0
        %v581 = vadd.f32 0.0, %v580
        %v582 = vpop.f32.mrf.mxu0
        %583 = vdwg.mxu0
        %v584 = vld [vmem:[%s181] sm:$0x1]
        %vm585 = vcmp.gt.f32.partialorder %v584, 0.5
        %v586 = vsel %vm585, -1e+10, %v581
        %vm587 = vcmask 253952
        %588 = vst.msk [vmem:[%s173] sm:$0x1] %vm587, %v586
        %s589 = sand.u32 %s98, 1
        %s590 = scalar_lea.sflag [#allocation3], %s589
        %s591 = sand.u32 %s98, 1
        %s592 = scalar_lea.vmem [#allocation2], %s591
        // Predicated region
        $region33: #{dummy_model_forward.1} parent=31 // pred_check
          %p593 = pneg %p108
        $region34: #{dummy_model_forward.1} parent=31 // pred_check_branch
          %595 = sbr.rel (%p593) target = $region36
        $region35: #{dummy_model_forward.1} parent=31 // pred_region
          %s597 = ssub.s32 16, 16
          %598 = vsyncadd %s590, %s597
          %s599 = smul.addr %s17, 16
          %s600 = scalar_lea.hbm %s3, %s599
          %s602 = sshll.u32 %s592, 4
          %s603 = int_to_ptr.vmem [resolvable:$true] %s602
          %605 = dma.vmem_to_hbm [thread:$0]  %s603, 16, %s600, %s590
        $region36: #{dummy_model_forward.1} parent=31 // pred_fallthru
          _
      $region32: #{dummy_model_forward.1} parent=5 // pred_fallthru
        _
      %p606 = scmp.le.s32.totalorder 2, %s12
      // Predicated region
      $region37: #{dummy_model_forward.1} parent=5 // pred_check
        %p607 = pneg %p606
      $region38: #{dummy_model_forward.1} parent=5 // pred_check_branch
        %609 = sbr.rel (%p607) target = $region40
      $region39: #{dummy_model_forward.1} parent=5 // pred_region
        %s610 = ssub.s32 %s12, 2
        // Predicated region
        $region41: #{dummy_model_forward.1} parent=39 // pred_check
          %p611 = pneg %p114
        $region42: #{dummy_model_forward.1} parent=39 // pred_check_branch
          %613 = sbr.rel (%p611) target = $region44
        $region43: #{dummy_model_forward.1} parent=39 // pred_region
          %s614 = sand.u32 %s99, 1
          %s615 = scalar_lea.sflag [#allocation3], %s614
          %s616 = sand.u32 %s99, 1
          %s617 = scalar_lea.vmem [#allocation2], %s616
          %618 = dma.done %s615, 16
        $region44: #{dummy_model_forward.1} parent=39 // pred_fallthru
          _
      $region40: #{dummy_model_forward.1} parent=5 // pred_fallthru
        _
    $region6: #{dummy_model_forward.1} parent=1 // loop_footer
      %s16 = sadd.s32 1, %s12
    $region7: #{dummy_model_forward.1} parent=1 // loop_footer_branch
      %11 = sbr.rel target = $region3
    $region8: #{dummy_model_forward.1} parent=1 // loop_exit
      _
    %619 = vsyncpa [#allocation3], 1
    %s620 = scalar_lea.sflag [#allocation3], 1
    %621 = vsyncpa %s620, 1

</llo_original>
